<compile_context>
chip_gen: v5e
topology: v5e:2x2
jax: 0.10.0
libtpu: 0.0.40
codegen_flags: <defaults>
</compile_context>

<pallas_src>
import functools

import jax
import jax.numpy as jnp
import numpy as np
from jax.experimental import pallas as pl
from jax.experimental.pallas import tpu as pltpu

LANES = 128                       # vreg lane width (last dim)
SUBLANES = 8                      # vreg sublanes (second-to-last dim, f32)
TILE = SUBLANES * LANES           # one whole (8,128) f32 vreg tile = 1024 elems
GRID_BLOCK_ROWS = 2048            # rows per grid step in the large-N path


def _vmem_capacity_bytes():
    try:
        return int(pltpu.get_tpu_info().vmem_capacity_bytes)
    except Exception:
        return 64 * 1024 * 1024   # conservative fallback (v7x per-core VMEM)


# ----------------------------- kernels ---------------------------------------
def _mse_sum_small_kernel(x_ref, t_ref, out_ref, *, padding_idx):
    """Gridless path: whole (R,128) slabs resident in VMEM, scalar out in SMEM."""
    t = t_ref[...]
    # Compare in the target's native dtype (no f32 round-trip for int targets).
    mask = t == jnp.asarray(padding_idx, dtype=t.dtype)
    true_dist = jnp.where(mask, jnp.float32(0.0), t.astype(jnp.float32))
    d = x_ref[...].astype(jnp.float32) - true_dist
    out_ref[0, 0] = jnp.sum(d * d)          # MSELoss(reduction='sum')


def _mse_sum_grid_kernel(x_ref, t_ref, out_ref, acc_ref, *, padding_idx):
    """Gridded reduction: (1,128) per-lane partials, one scalar reduce at end."""
    i = pl.program_id(0)

    @pl.when(i == 0)
    def _():
        acc_ref[...] = jnp.zeros_like(acc_ref)

    t = t_ref[...]
    mask = t == jnp.asarray(padding_idx, dtype=t.dtype)
    true_dist = jnp.where(mask, jnp.float32(0.0), t.astype(jnp.float32))
    d = x_ref[...].astype(jnp.float32) - true_dist
    # Per-lane partials: keeps the per-step body free of a full cross-lane
    # reduce + SMEM scalar store, so the DMA-bound pipeline has no serial tail.
    acc_ref[...] += jnp.sum(d * d, axis=0, keepdims=True)

    @pl.when(i == pl.num_programs(0) - 1)
    def _():
        out_ref[0, 0] = jnp.sum(acc_ref[...])   # single cross-lane reduce


# ----------------------------- wrapper ----------------------------------------
def _pad_flat(v, total, fill):
    pad = total - v.shape[0]
    if pad:
        v = jnp.pad(v, (0, pad), constant_values=fill)
    return v


@functools.partial(
    jax.jit, static_argnames=("padding_idx", "force_grid", "block_rows")
)
def mse_loss(x, target, padding_idx, force_grid=False, block_rows=GRID_BLOCK_ROWS):
    """sum((x - true_dist)^2), true_dist = target masked to 0 where == padding_idx.

    Inputs are passed in their native dtypes (casts happen in-kernel) and padded
    to whole (8,128) tiles; padded lanes carry (x=0, t=padding_idx) so they
    contribute exactly 0 to the sum.
    NOTE: `self.true_dist` in the PyTorch module is a cached training-time side
    buffer, not part of the forward return, so it is not emitted here.
    """
    n = int(np.prod(target.shape))
    if n == 0:
        return jnp.zeros((), jnp.float32)

    xf = x.reshape(n)            # native dtype: halves DMA bytes vs f32 pre-cast
    tf = target.reshape(n)

    bytes_per_elem = xf.dtype.itemsize + tf.dtype.itemsize
    npad_small = pl.cdiv(n, TILE) * TILE
    use_grid = force_grid or (
        npad_small * bytes_per_elem > _vmem_capacity_bytes() // 4
    )

    cost = pl.CostEstimate(
        flops=3 * n, transcendentals=0, bytes_accessed=n * bytes_per_elem + 4
    )

    if not use_grid:
        # ---- tiny / overhead-bound path: no grid, two DMAs, SMEM scalar out --
        xp = _pad_flat(xf, npad_small, 0).reshape(-1, LANES)
        tp = _pad_flat(tf, npad_small, padding_idx).reshape(-1, LANES)
        kernel = functools.partial(_mse_sum_small_kernel, padding_idx=padding_idx)
        out = pl.pallas_call(
            kernel,
            out_shape=jax.ShapeDtypeStruct((1, 1), jnp.float32),
            in_specs=[
                pl.BlockSpec(memory_space=pltpu.MemorySpace.VMEM),
                pl.BlockSpec(memory_space=pltpu.MemorySpace.VMEM),
            ],
            out_specs=pl.BlockSpec(memory_space=pltpu.MemorySpace.SMEM),
            cost_estimate=cost,
        )(xp, tp)
        return out[0, 0]

    # ---- large-N path: 1-D grid over rows, pipelined reduction ---------------
    # TODO(synk): on v7x (2 TensorCores) a leading "parallel" axis of size 2
    # with per-core partial sums could ~2x the HBM sweep rate.
    chunk = block_rows * LANES
    npad = pl.cdiv(n, chunk) * chunk
    xp = _pad_flat(xf, npad, 0).reshape(-1, LANES)
    tp = _pad_flat(tf, npad, padding_idx).reshape(-1, LANES)
    steps = npad // chunk
    kernel = functools.partial(_mse_sum_grid_kernel, padding_idx=padding_idx)
    out = pl.pallas_call(
        kernel,
        out_shape=jax.ShapeDtypeStruct((1, 1), jnp.float32),
        grid_spec=pltpu.PrefetchScalarGridSpec(
            num_scalar_prefetch=0,
            grid=(steps,),
            in_specs=[
                pl.BlockSpec((block_rows, LANES), lambda i: (i, 0)),
                pl.BlockSpec((block_rows, LANES), lambda i: (i, 0)),
            ],
            out_specs=pl.BlockSpec(
                (1, 1), lambda i: (0, 0), memory_space=pltpu.MemorySpace.SMEM
            ),
            scratch_shapes=[pltpu.VMEM((1, LANES), jnp.float32)],
        ),
        compiler_params=pltpu.CompilerParams(
            dimension_semantics=("arbitrary",),
        ),
        cost_estimate=cost,
    )(xp, tp)
    return out[0, 0]


# ----------------------------- reference (plain JAX) --------------------------
def mse_loss_ref(x, target, padding_idx):
    true_dist = jnp.where(target == padding_idx, 0.0, target)[:, None]
    return jnp.sum(
        (x.astype(jnp.float32) - true_dist.astype(jnp.float32)) ** 2
    )


# ----------------------------- main --------------------------------------------
if __name__ == "__main__":
    PADDING_IDX = 0.0
    B, S = 2, 8
    N = B * S  # module operates on flattened (batch*seq) rows

    key = jax.random.PRNGKey(0)
    kx, kt = jax.random.split(key)
    x = jax.random.normal(kx, (N, 1), jnp.float32)
    target = jax.random.normal(kt, (N,), jnp.float32)
    # make some targets exactly equal to padding_idx so the mask path is live
    target = target.at[jnp.array([0, 5, 11])].set(PADDING_IDX)

    loss = mse_loss(x, target, padding_idx=PADDING_IDX)
    loss = jax.block_until_ready(loss)
    ref = mse_loss_ref(x, target, PADDING_IDX)
    assert loss.shape == ()
    assert jnp.allclose(loss, ref, atol=1e-4, rtol=1e-4), (loss, ref)

    # Exercise the gridded large-N path (forced, small block) and in-kernel
    # bf16 -> f32 cast of the activations.
    N2 = 3000
    k2x, k2t = jax.random.split(jax.random.PRNGKey(1))
    x2 = jax.random.normal(k2x, (N2, 1), jnp.float32).astype(jnp.bfloat16)
    t2 = jax.random.normal(k2t, (N2,), jnp.float32)
    t2 = t2.at[::7].set(PADDING_IDX)
    loss2 = mse_loss(
        x2, t2, padding_idx=PADDING_IDX, force_grid=True, block_rows=8
    )
    loss2 = jax.block_until_ready(loss2)
    ref2 = mse_loss_ref(x2, t2, PADDING_IDX)
    assert jnp.allclose(loss2, ref2, atol=1e-3, rtol=1e-3), (loss2, ref2)

    print("KERNEL_OK")
</pallas_src>

<mosaic_0001>
module attributes {stable_mosaic.version = 11 : i64} {
  func.func @_mse_sum_small_kernel(%arg0: memref<8x128xf32, #tpu.memory_space<vmem>>, %arg1: memref<8x128xf32, #tpu.memory_space<vmem>>, %arg2: memref<1x1xf32, #tpu.memory_space<smem>>) attributes {dimension_semantics = [], scalar_prefetch = 0 : i64, scratch_operands = 0 : i64, tpu.core_type = #tpu.core_type<tc>} {
    %c0 = arith.constant 0 : index
    %c0_0 = arith.constant 0 : index
    %0 = vector.load %arg1[%c0, %c0_0] : memref<8x128xf32, #tpu.memory_space<vmem>>, vector<8x128xf32>
    %cst = arith.constant 0.000000e+00 : f32
    %1 = vector.broadcast %cst : f32 to vector<8x128xf32>
    %2 = arith.cmpf oeq, %0, %1 : vector<8x128xf32>
    %cst_1 = arith.constant 0.000000e+00 : f32
    %3 = vector.broadcast %cst_1 : f32 to vector<8x128xf32>
    %4 = arith.select %2, %3, %0 : vector<8x128xi1>, vector<8x128xf32>
    %c0_2 = arith.constant 0 : index
    %c0_3 = arith.constant 0 : index
    %5 = vector.load %arg0[%c0_2, %c0_3] : memref<8x128xf32, #tpu.memory_space<vmem>>, vector<8x128xf32>
    %6 = arith.subf %5, %4 : vector<8x128xf32>
    %7 = arith.mulf %6, %6 : vector<8x128xf32>
    %8 = vector.shape_cast %7 : vector<8x128xf32> to vector<1x8x128xf32>
    %cst_4 = arith.constant dense<0.000000e+00> : vector<1xf32>
    %9 = vector.multi_reduction <add>, %8, %cst_4 [1, 2] : vector<1x8x128xf32> to vector<1xf32>
    %10 = vector.shape_cast %9 : vector<1xf32> to vector<1x1x1xf32>
    %11 = vector.extract %10[0, 0, 0] : f32 from vector<1x1x1xf32>
    %c0_5 = arith.constant 0 : index
    %c0_6 = arith.constant 0 : index
    %12 = memref.load %arg2[%c0_5, %c0_6] : memref<1x1xf32, #tpu.memory_space<smem>>
    memref.store %11, %arg2[%c0_5, %c0_6] : memref<1x1xf32, #tpu.memory_space<smem>>
    return
  }
}

</mosaic_0001>

<llo_original>
// kernel: mse_loss.1
$region0: #{mse_loss.1}
  #allocation0 [shape = 'u32[]', space=smem, size = 0x4, offset = 0x4, fixed_abs, tag = 'smem constant byte address 0x4 - core index']
  #allocation1 [shape = 'u32[72,128]{1,0:T(1,128)}', space=vmem, size = 0x9000, scoped, tag = 'internal scratch']
  %s0 = inlined_call_operand.vmem [shape: f32[8,128], index: 0, kind: input, shape index: {}]
  %s1 = inlined_call_operand.vmem [shape: f32[8,128], index: 1, kind: input, shape index: {}]
  %s2 = inlined_call_operand.hbm [shape: f32[1,1], index: 2, kind: output, shape index: {}]
  %s3 = sld [smem:[#allocation0]]
  $region18: #{mse_loss.1} parent=0
    _
  %s5 = ssub.s32 1, %s3
  %s6 = scalar_select 0, %s5, %s3
  $region1: #{mse_loss.1} parent=0
    #allocation2 [shape = 'u8[512]{0}', space=smem, size = 0x200, scoped, tag = 'output window, operand 0, single buffered']
    #allocation3 [shape = 's32[1]{0}', space=sflag, size = 0x4, scoped, tag = 'scoped memory for mse_loss.1']
    %7 = vsyncpa [#allocation3], 0
    // Predicated region
    $region2: #{mse_loss.1} parent=1 // pred_check
      _
    $region3: #{mse_loss.1} parent=1 // pred_check_branch
      %9 = sbr.rel (0) target = $region5
    $region4: #{mse_loss.1} parent=1 // pred_region
      _
    $region5: #{mse_loss.1} parent=1 // pred_fallthru
      _
    // Predicated region
    $region6: #{mse_loss.1} parent=1 // pred_check
      _
    $region7: #{mse_loss.1} parent=1 // pred_check_branch
      %11 = sbr.rel (0) target = $region9
    $region8: #{mse_loss.1} parent=1 // pred_region
      _
    $region9: #{mse_loss.1} parent=1 // pred_fallthru
      _
    %v12 = vld [vmem:[%s1] sm:$0xff]
    %vm13 = vcmp.eq.f32.partialorder %v12, 0.0
    %v14 = vsel %vm13, 0.0, %v12
    %v15 = vld [vmem:[%s0] sm:$0xff]
    %v16 = vsub.f32 %v15, %v14
    %v17 = vmul.f32 %v16, %v16
    %18 = vadd.xlane.f32.xlu0 %v17
    %v19 = vpop.xlane.xlu0 %18
    %v20 = vrot.slane %v19, 4
    %v21 = vadd.f32 %v19, %v20
    %v22 = vrot.slane %v21, 2
    %v23 = vadd.f32 %v21, %v22
    %v24 = vrot.slane %v23, 1
    %v25 = vadd.f32 %v23, %v24
    %s26 = vtos %v25
    %s27 = scalar_lea.smem [#allocation2], 0
    %28 = sst [smem:[%s27]] %s26
    // Predicated region
    $region10: #{mse_loss.1} parent=1 // pred_check
      _
    $region11: #{mse_loss.1} parent=1 // pred_check_branch
      %30 = sbr.rel (0) target = $region13
    $region12: #{mse_loss.1} parent=1 // pred_region
      %32 = vsyncadd [#allocation3], 0
      %s34 = sshll.u32 %s2, 4
      %s35 = int_to_ptr.hbm [resolvable:$true] %s34
      %37 = dma.smem_to_hbm [#allocation2], 16, %s35, [#allocation3]
    $region13: #{mse_loss.1} parent=1 // pred_fallthru
      _
    // Predicated region
    $region14: #{mse_loss.1} parent=1 // pred_check
      _
    $region15: #{mse_loss.1} parent=1 // pred_check_branch
      %39 = sbr.rel (0) target = $region17
    $region16: #{mse_loss.1} parent=1 // pred_region
      %41 = dma.done [#allocation3], 16
    $region17: #{mse_loss.1} parent=1 // pred_fallthru
      _
    %42 = sfence
    %43 = vsyncpa [#allocation3], 1

</llo_original>
